<compile_context>
chip_gen: v6e
topology: v6e:2x2x1
jax: 0.10.0
libtpu: 0.0.40
codegen_flags: <defaults>
</compile_context>

<pallas_src>
import functools

import jax
import jax.numpy as jnp
from jax.experimental import pallas as pl
from jax.experimental.pallas import tpu as pltpu


def _round_up(x, m):
    return ((x + m - 1) // m) * m


def _pick_tile_n(c_out_pad):
    """Largest multiple-of-128 divisor of c_out_pad that is <= 512 lanes."""
    m = c_out_pad // 128
    for d in (4, 3, 2, 1):
        if m % d == 0:
            return 128 * d
    return 128


def _convtbc_kernel(x_ref, w_ref, b_ref, o_ref, *, taps, batch, tile_rows):
    """One (row-tile, cout-tile) of ConvTBC as `taps` accumulating MXU matmuls.

    x_ref: (tile_rows [+ (taps-1)*batch halo], C_in_eff)  flattened (time*batch, chan) rows
    w_ref: (taps, C_in_eff, TILE_N)
    b_ref: (1, TILE_N) float32
    o_ref: (tile_rows, TILE_N)
    """
    acc = b_ref[...].astype(jnp.float32)          # (1, TILE_N), broadcasts over rows
    for k in range(taps):                         # static, unrolled; taps == 1 on the folded path
        acc = acc + jnp.dot(
            x_ref[k * batch:k * batch + tile_rows, :],
            w_ref[k],
            preferred_element_type=jnp.float32,   # f32 accumulation on the MXU
        )
    o_ref[...] = acc.astype(o_ref.dtype)


def conv_tbc(x, weight, bias, padding=0, *, compute_dtype=None,
             vmem_budget_bytes=16 * 1024 * 1024):
    """TPU Pallas ConvTBC.  x: (T, B, C_in), weight: (K, C_in, C_out), bias: (C_out,)."""
    T, B, C_in = x.shape
    K, wc_in, C_out = weight.shape
    assert wc_in == C_in
    T_out = T + 2 * padding - K + 1
    assert T_out > 0, "invalid conv configuration"

    out_dtype = x.dtype
    if compute_dtype is None:
        compute_dtype = x.dtype
    in_bytes = jnp.dtype(compute_dtype).itemsize
    out_bytes = jnp.dtype(out_dtype).itemsize

    # ---- lane-dense output channels: pad C_out up to a multiple of 128 ----
    c_out_pad = _round_up(C_out, 128)
    tile_n = _pick_tile_n(c_out_pad)
    num_col_tiles = c_out_pad // tile_n

    rows_out = T_out * B

    # Fold the K taps into one deep contraction (im2col along channels) when C_in is
    # small: fixes MXU contraction under-fill and lets us use plain Blocked specs.
    # For wide channels each tap is already a deep matmul, so keep K taps with a
    # halo'd element-indexed input window and avoid K-fold HBM read amplification.
    use_im2col = (K == 1) or (K * C_in <= 256)
    if use_im2col:
        taps, c_in_eff = 1, K * C_in
    else:
        taps, c_in_eff = K, C_in

    # ---- tile the flattened (time*batch) rows against an explicit VMEM budget ----
    per_row = (2 * c_in_eff * in_bytes       # x tile, double-buffered
               + 2 * tile_n * out_bytes      # out tile, double-buffered
               + tile_n * 4)                 # f32 accumulator value
    fixed = 2 * taps * c_in_eff * tile_n * in_bytes + 2 * tile_n * 4   # weights + bias
    avail = max(vmem_budget_bytes - fixed, 1 << 20)
    tile_rows = min(avail // per_row, _round_up(rows_out, 8), 4096)
    tile_rows = max(8, (tile_rows // 8) * 8)          # sublane-aligned
    rows_out_pad = _round_up(rows_out, tile_rows)
    num_row_tiles = rows_out_pad // tile_rows

    # ---- build kernel inputs (flattened rows, conv zero-padding folded into one pad) ----
    x_flat = x.reshape(T * B, C_in)

    if use_im2col:
        lead = padding * B
        x_padded = jnp.pad(x_flat, ((lead, lead), (0, 0))) if lead else x_flat
        # im2col: K row-shifted windows concatenated along channels -> (rows_out, K*C_in)
        x_in = jnp.concatenate(
            [x_padded[k * B:k * B + rows_out, :] for k in range(K)], axis=1)
        if rows_out_pad != rows_out:
            x_in = jnp.pad(x_in, ((0, rows_out_pad - rows_out), (0, 0)))
        x_in = x_in.astype(compute_dtype)
        x_spec = pl.BlockSpec((tile_rows, c_in_eff), lambda i, j: (i, 0))
        w_in = weight.reshape(1, K * C_in, C_out)
    else:
        # halo'd row windows: consecutive tiles overlap by (K-1)*B rows
        halo_rows = _round_up(tile_rows + (K - 1) * B, 8)
        rows_in_needed = (num_row_tiles - 1) * tile_rows + halo_rows
        lead = padding * B
        trail = rows_in_needed - lead - T * B          # >= padding*B >= 0 by construction
        if lead or trail:
            x_in = jnp.pad(x_flat, ((lead, trail), (0, 0)))
        else:
            x_in = x_flat
        x_in = x_in.astype(compute_dtype)
        # element-indexed (overlapping) block on the row dim; offsets are multiples of 8
        x_spec = pl.BlockSpec((pl.Element(halo_rows), C_in),
                              lambda i, j: (i * tile_rows, 0))
        w_in = weight

    if c_out_pad != C_out:
        w_in = jnp.pad(w_in, ((0, 0), (0, 0), (0, c_out_pad - C_out)))
        b_pad = jnp.pad(bias, (0, c_out_pad - C_out))
    else:
        b_pad = bias
    w_in = w_in.astype(compute_dtype)
    b_in = b_pad.reshape(1, c_out_pad).astype(jnp.float32)

    kernel = functools.partial(_convtbc_kernel, taps=taps, batch=B, tile_rows=tile_rows)

    out_padded = pl.pallas_call(
        kernel,
        out_shape=jax.ShapeDtypeStruct((rows_out_pad, c_out_pad), out_dtype),
        grid_spec=pltpu.PrefetchScalarGridSpec(
            num_scalar_prefetch=0,
            grid=(num_row_tiles, num_col_tiles),
            in_specs=[
                x_spec,                                                       # rows tile (reused across j)
                pl.BlockSpec((taps, c_in_eff, tile_n), lambda i, j: (0, 0, j)),  # weight col tile
                pl.BlockSpec((1, tile_n), lambda i, j: (0, j)),                  # bias col tile
            ],
            out_specs=pl.BlockSpec((tile_rows, tile_n), lambda i, j: (i, j)),
        ),
        compiler_params=pltpu.CompilerParams(
            dimension_semantics=("parallel", "parallel"),   # megacore-shardable on v7x
            vmem_limit_bytes=32 * 1024 * 1024,              # explicit; safe on v5e/v6e/v7x
        ),
    )(x_in, w_in, b_in)

    return out_padded[:rows_out, :C_out].reshape(T_out, B, C_out)


def _reference_conv_tbc(x, weight, bias, padding=0):
    T, B, C_in = x.shape
    K, _, C_out = weight.shape
    T_out = T + 2 * padding - K + 1
    x_pad = jnp.pad(x, ((padding, padding), (0, 0), (0, 0)))
    out = jnp.zeros((T_out, B, C_out), jnp.float32)
    for k in range(K):
        out = out + jnp.einsum("tbc,co->tbo",
                               x_pad[k:k + T_out].astype(jnp.float32),
                               weight[k].astype(jnp.float32))
    return (out + bias.astype(jnp.float32)).astype(x.dtype)


if __name__ == "__main__":
    # Small shapes consistent with the module's forward: (time, batch, channel).
    T, B, C_in, C_out, K, padding = 16, 2, 8, 16, 3, 1

    key = jax.random.PRNGKey(0)
    kx, kw, kb = jax.random.split(key, 3)

    x = jax.random.normal(kx, (T, B, C_in), dtype=jnp.float32)

    # Deterministic init mimicking kaiming_uniform_(a=sqrt(5)) + uniform bias.
    # PyTorch fan_in for a (K, C_in, C_out) tensor = C_in * C_out.
    fan_in = C_in * C_out
    gain = (2.0 / (1.0 + 5.0)) ** 0.5
    w_bound = gain * (3.0 / fan_in) ** 0.5
    weight = jax.random.uniform(kw, (K, C_in, C_out), dtype=jnp.float32,
                                minval=-w_bound, maxval=w_bound)
    b_bound = 1.0 / fan_in ** 0.5
    bias = jax.random.uniform(kb, (C_out,), dtype=jnp.float32,
                              minval=-b_bound, maxval=b_bound)

    ref = _reference_conv_tbc(x, weight, bias, padding=padding)

    # f32 compute path (tight tolerance)
    out = jax.block_until_ready(conv_tbc(x, weight, bias, padding=padding))
    assert out.shape == (T + 2 * padding - K + 1, B, C_out)
    assert jnp.allclose(out, ref, atol=1e-5, rtol=1e-5), "f32 mismatch vs reference"

    # bf16 MXU fast path (f32 accumulation) — looser tolerance
    out_bf16 = jax.block_until_ready(
        conv_tbc(x, weight, bias, padding=padding, compute_dtype=jnp.bfloat16))
    assert out_bf16.shape == ref.shape
    assert jnp.allclose(out_bf16, ref, atol=3e-2, rtol=3e-2), "bf16 mismatch vs reference"

    print("KERNEL_OK")
</pallas_src>

<mosaic_0001>
module attributes {stable_mosaic.version = 11 : i64} {
  func.func @_convtbc_kernel(%arg0: i32, %arg1: i32, %arg2: memref<32x24xf32, #tpu.memory_space<vmem>>, %arg3: memref<1x24x128xf32, #tpu.memory_space<vmem>>, %arg4: memref<1x128xf32, #tpu.memory_space<vmem>>, %arg5: memref<32x128xf32, #tpu.memory_space<vmem>>) attributes {dimension_semantics = [#tpu.dimension_semantics<parallel>, #tpu.dimension_semantics<parallel>], iteration_bounds = array<i64: 1, 1>, scalar_prefetch = 0 : i64, scratch_operands = 0 : i64, tpu.core_type = #tpu.core_type<tc>, window_params = [{transform_indices = @transform_0, window_bounds = array<i64: 32, 24>}, {transform_indices = @transform_1, window_bounds = array<i64: 1, 24, 128>}, {transform_indices = @transform_2, window_bounds = array<i64: 1, 128>}, {transform_indices = @transform_3, window_bounds = array<i64: 32, 128>}]} {
    %c0 = arith.constant 0 : index
    %c0_0 = arith.constant 0 : index
    %0 = vector.load %arg4[%c0, %c0_0] : memref<1x128xf32, #tpu.memory_space<vmem>>, vector<1x128xf32>
    %c0_1 = arith.constant 0 : index
    %c0_2 = arith.constant 0 : index
    %1 = vector.load %arg2[%c0_1, %c0_2] : memref<32x24xf32, #tpu.memory_space<vmem>>, vector<32x24xf32>
    %c0_3 = arith.constant 0 : index
    %c0_4 = arith.constant 0 : index
    %c0_5 = arith.constant 0 : index
    %2 = vector.load %arg3[%c0_3, %c0_4, %c0_5] : memref<1x24x128xf32, #tpu.memory_space<vmem>>, vector<1x24x128xf32>
    %3 = vector.shape_cast %2 : vector<1x24x128xf32> to vector<24x128xf32>
    %cst = arith.constant dense<0.000000e+00> : vector<32x128xf32>
    %4 = tpu.matmul %1, %3, %cst {dimension_numbers = #tpu.dot_dimension_numbers<[1], [0], [0], [1], [0, 0, 1, 1], [], []>} : vector<32x24xf32>, vector<24x128xf32>, vector<32x128xf32> -> vector<32x128xf32>
    %5 = vector.broadcast %0 : vector<1x128xf32> to vector<32x128xf32>
    %6 = arith.addf %5, %4 : vector<32x128xf32>
    %c0_6 = arith.constant 0 : index
    %c0_7 = arith.constant 0 : index
    %7 = vector.load %arg5[%c0_6, %c0_7] : memref<32x128xf32, #tpu.memory_space<vmem>>, vector<32x128xf32>
    tpu.vector_store %arg5[%c0_6, %c0_7], %6 {strides = array<i32>} : memref<32x128xf32, #tpu.memory_space<vmem>>, vector<32x128xf32>,
    return
  }
  func.func @transform_0(%arg0: i32, %arg1: i32) -> (i32, i32) {
    %c0_i32 = arith.constant 0 : i32
    %c0_i32_0 = arith.constant 0 : i32
    return %arg0, %c0_i32 : i32, i32
  }
  func.func @transform_1(%arg0: i32, %arg1: i32) -> (i32, i32, i32) {
    %c0_i32 = arith.constant 0 : i32
    %c0_i32_0 = arith.constant 0 : i32
    %c0_i32_1 = arith.constant 0 : i32
    return %c0_i32, %c0_i32_0, %arg1 : i32, i32, i32
  }
  func.func @transform_2(%arg0: i32, %arg1: i32) -> (i32, i32) {
    %c0_i32 = arith.constant 0 : i32
    %c0_i32_0 = arith.constant 0 : i32
    return %c0_i32, %arg1 : i32, i32
  }
  func.func @transform_3(%arg0: i32, %arg1: i32) -> (i32, i32) {
    %c0_i32 = arith.constant 0 : i32
    return %arg0, %arg1 : i32, i32
  }
}

</mosaic_0001>

<llo_original>
// kernel: tpu_custom_call.1
$region0: #{tpu_custom_call.1}
  #allocation0 [shape = 'u32[]', space=smem, size = 0x4, offset = 0x4, fixed_abs, tag = 'smem constant byte address 0x4 - core index']
  #allocation1 [shape = 'u32[144,128]{1,0:T(1,128)}', space=vmem, size = 0x12000, scoped, tag = 'internal scratch']
  %s0 = inlined_call_operand.vmem [shape: f32[32,24], index: 0, kind: input, shape index: {}]
  %s1 = inlined_call_operand.vmem [shape: f32[1,24,128], index: 1, kind: input, shape index: {}]
  %s2 = inlined_call_operand.vmem [shape: f32[1,128], index: 2, kind: input, shape index: {}]
  %s3 = inlined_call_operand.hbm [shape: f32[32,128], index: 3, kind: output, shape index: {}]
  %s4 = sld [smem:[#allocation0]]
  $region22: #{tpu_custom_call.1} parent=0
    _
  %s6 = ssub.s32 1, %s4
  %s7 = scalar_select 0, %s6, %s4
  $region1: #{tpu_custom_call.1} parent=0
    #allocation2 [shape = 'u8[16384]{0}', space=vmem, size = 0x4000, scoped, tag = 'output window, operand 0, single buffered']
    #allocation3 [shape = 's32[1]{0}', space=sflag, size = 0x4, scoped, tag = 'scoped memory for tpu_custom_call.1']
    %8 = vsyncpa [#allocation3], 0
    // Predicated region
    $region2: #{tpu_custom_call.1} parent=1 // pred_check
      _
    $region3: #{tpu_custom_call.1} parent=1 // pred_check_branch
      %10 = sbr.rel (0) target = $region5
    $region4: #{tpu_custom_call.1} parent=1 // pred_region
      _
    $region5: #{tpu_custom_call.1} parent=1 // pred_fallthru
      _
    // Predicated region
    $region6: #{tpu_custom_call.1} parent=1 // pred_check
      _
    $region7: #{tpu_custom_call.1} parent=1 // pred_check_branch
      %12 = sbr.rel (0) target = $region9
    $region8: #{tpu_custom_call.1} parent=1 // pred_region
      _
    $region9: #{tpu_custom_call.1} parent=1 // pred_fallthru
      _
    // Predicated region
    $region10: #{tpu_custom_call.1} parent=1 // pred_check
      _
    $region11: #{tpu_custom_call.1} parent=1 // pred_check_branch
      %14 = sbr.rel (0) target = $region13
    $region12: #{tpu_custom_call.1} parent=1 // pred_region
      _
    $region13: #{tpu_custom_call.1} parent=1 // pred_fallthru
      _
    %v15 = vld [vmem:[%s2] sm:$0x1]
    %v16 = vld [vmem:[%s0] sm:$0xff]
    %v17 = vld [vmem:[%s0 + $0x8] sm:$0xff]
    %v18 = vld [vmem:[%s0 + $0x10] sm:$0xff]
    %v19 = vld [vmem:[%s0 + $0x18] sm:$0xff]
    %v20 = vld [vmem:[%s1] sm:$0xff]
    %v21 = vld [vmem:[%s1 + $0x8] sm:$0xff]
    %v22 = vld [vmem:[%s1 + $0x10] sm:$0xff]
    %vm23 = vcmask 195584
    %v25 = vsel %vm23, %v16, 0
    %v28 = vsel %vm23, %v17, 0
    %v31 = vsel %vm23, %v18, 0
    %v34 = vsel %vm23, %v19, 0
    %36 = vmatprep.subr.mxu0 0.0
    %37 = vmatpush1.msra.mxu0 0.0
    %38 = vmatprep.subr.mxu0 0.0
    %39 = vmatpush1.msra.mxu0 0.0
    %40 = vmatprep.subr.mxu0 0.0
    %41 = vmatpush1.msra.mxu0 0.0
    %42 = vmatprep.subr.mxu0 0.0
    %43 = vmatpush1.msra.mxu0 0.0
    %44 = vmatprep.subr.mxu0 0.0
    %45 = vmatpush1.msra.mxu0 0.0
    %46 = vmatprep.subr.mxu0 0.0
    %47 = vmatpush1.msra.mxu0 0.0
    %48 = vmatprep.subr.mxu0 0.0
    %49 = vmatpush1.msra.mxu0 0.0
    %50 = vmatprep.subr.mxu0 0.0
    %51 = vmatpush1.msra.mxu0 0.0
    %52 = vmatprep.subr.mxu0 0.0
    %53 = vmatpush1.msra.mxu0 0.0
    %54 = vmatprep.subr.mxu0 0.0
    %55 = vmatpush1.msra.mxu0 0.0
    %56 = vmatprep.subr.mxu0 0.0
    %57 = vmatpush1.msra.mxu0 0.0
    %58 = vmatprep.subr.mxu0 0.0
    %59 = vmatpush1.msra.mxu0 0.0
    %60 = vmatprep.subr.mxu0 0.0
    %61 = vmatpush1.msra.mxu0 0.0
    %62 = vmatprep.subr.mxu0 0.0
    %63 = vmatpush1.msra.mxu0 %v22
    %64 = vmatprep.subr.mxu0 0.0
    %65 = vmatpush1.msra.mxu0 %v21
    %66 = vmatprep.subr.mxu0 0.0
    %67 = vmatpush1.msra.mxu0 %v20
    %68 = vmatprep.subr.mxu0 0.0
    %69 = vmatpush2.msra.mxu0 0.0
    %70 = vmatprep.subr.mxu0 0.0
    %71 = vmatpush2.msra.mxu0 0.0
    %72 = vmatprep.subr.mxu0 0.0
    %73 = vmatpush2.msra.mxu0 0.0
    %74 = vmatprep.subr.mxu0 0.0
    %75 = vmatpush2.msra.mxu0 0.0
    %76 = vmatprep.subr.mxu0 0.0
    %77 = vmatpush2.msra.mxu0 0.0
    %78 = vmatprep.subr.mxu0 0.0
    %79 = vmatpush2.msra.mxu0 0.0
    %80 = vmatprep.subr.mxu0 0.0
    %81 = vmatpush2.msra.mxu0 0.0
    %82 = vmatprep.subr.mxu0 0.0
    %83 = vmatpush2.msra.mxu0 0.0
    %84 = vmatprep.subr.mxu0 0.0
    %85 = vmatpush2.msra.mxu0 0.0
    %86 = vmatprep.subr.mxu0 0.0
    %87 = vmatpush2.msra.mxu0 0.0
    %88 = vmatprep.subr.mxu0 0.0
    %89 = vmatpush2.msra.mxu0 0.0
    %90 = vmatprep.subr.mxu0 0.0
    %91 = vmatpush2.msra.mxu0 0.0
    %92 = vmatprep.subr.mxu0 0.0
    %93 = vmatpush2.msra.mxu0 0.0
    %94 = vmatprep.subr.mxu0 0.0
    %95 = vmatpush2.msra.mxu0 0.0
    %96 = vmatprep.subr.mxu0 0.0
    %97 = vmatpush2.msra.mxu0 0.0
    %98 = vmatprep.subr.mxu0 0.0
    %99 = vmatpush2.msra.mxu0 0.0
    %100 = vmatprep.mubr.f32.mxu0 0.0
    %101 = vmatmul.mubr.f32.gmra.mxu0 %v25
    %v102 = vpop.f32.mrf.mxu0
    %v103 = vadd.f32 0.0, %v102
    %v104 = vpop.f32.mrf.mxu0
    %105 = vmatprep.mubr.f32.mxu0 0.0
    %106 = vmatmul.mubr.f32.gmra.mxu0 %v28
    %v107 = vpop.f32.mrf.mxu0
    %v108 = vadd.f32 0.0, %v107
    %v109 = vpop.f32.mrf.mxu0
    %110 = vmatprep.mubr.f32.mxu0 0.0
    %111 = vmatmul.mubr.f32.gmra.mxu0 %v31
    %v112 = vpop.f32.mrf.mxu0
    %v113 = vadd.f32 0.0, %v112
    %v114 = vpop.f32.mrf.mxu0
    %115 = vmatprep.mubr.f32.mxu0 0.0
    %116 = vmatmul.mubr.f32.gmra.mxu0 %v34
    %v117 = vpop.f32.mrf.mxu0
    %v118 = vadd.f32 0.0, %v117
    %v119 = vpop.f32.mrf.mxu0
    %120 = vdwg.mxu0
    %v122 = vlaneseq
    %v123 = vshrl.u32 %v122, 7
    %v124 = vsub.s32 0, %v123
    %v125 = vrot.slane %v15, %v124
    %v127 = vadd.f32 %v125, %v103
    %v128 = vadd.f32 %v125, %v108
    %v129 = vadd.f32 %v125, %v113
    %v130 = vadd.f32 %v125, %v118
    %131 = vst [vmem:[#allocation2] sm:$0xff] %v127
    %132 = vst [vmem:[#allocation2 + $0x8] sm:$0xff] %v128
    %133 = vst [vmem:[#allocation2 + $0x10] sm:$0xff] %v129
    %134 = vst [vmem:[#allocation2 + $0x18] sm:$0xff] %v130
    // Predicated region
    $region14: #{tpu_custom_call.1} parent=1 // pred_check
      _
    $region15: #{tpu_custom_call.1} parent=1 // pred_check_branch
      %136 = sbr.rel (0) target = $region17
    $region16: #{tpu_custom_call.1} parent=1 // pred_region
      %s138 = ssub.s32 512, 512
      %139 = vsyncadd [#allocation3], %s138
      %s140 = sshll.u32 [#allocation2], 4
      %s141 = int_to_ptr.vmem [resolvable:$true] %s140
      %146 = dma.vmem_to_hbm [thread:$0]  %s141, 512, %s3, [#allocation3], 128, 128, 8
    $region17: #{tpu_custom_call.1} parent=1 // pred_fallthru
      _
    // Predicated region
    $region18: #{tpu_custom_call.1} parent=1 // pred_check
      _
    $region19: #{tpu_custom_call.1} parent=1 // pred_check_branch
      %148 = sbr.rel (0) target = $region21
    $region20: #{tpu_custom_call.1} parent=1 // pred_region
      %149 = dma.done [#allocation3], 512
    $region21: #{tpu_custom_call.1} parent=1 // pred_fallthru
      _
    %150 = vsyncpa [#allocation3], 1

</llo_original>
